<compile_context>
chip_gen: v6e
topology: v6e:2x2x1
jax: 0.10.0
libtpu: 0.0.40
codegen_flags: <defaults>
</compile_context>

<pallas_src>
import functools
from typing import NamedTuple, Optional

import jax
import jax.numpy as jnp
from jax.experimental import pallas as pl
from jax.experimental.pallas import tpu as pltpu

_LANE = 128          # lane width (last dim alignment)
_SUBLANE = 16        # sublane alignment (safe for bf16 and f32 tiles)
_MIB = 1 << 20

_VMEM_BUDGET = 28 * _MIB      # target double-buffered working set (all gens)
_VMEM_LIMIT = 48 * _MIB       # scoped VMEM limit requested from Mosaic
_W_RESIDENT_MAX = 16 * _MIB   # max (double-buffered) padded bf16 weight in VMEM


def _round_up(x: int, m: int) -> int:
    return (x + m - 1) // m * m


def _choose_tile(dim: int, *, target: int, align: int,
                 max_single: Optional[int] = None):
    """Pick (tile, padded_dim) with tile % align == 0 and padded_dim % tile == 0.

    Prefers zero padding beyond `align` over hitting `target` exactly:
      * aligned dim fits one tile (<= max_single)     -> use it whole,
      * a multiple-of-align tile <= target divides it -> use that (no extra pad),
      * otherwise pick the candidate minimizing total padding.
    """
    aligned = _round_up(dim, align)
    max_single = target if max_single is None else max_single
    if aligned <= max_single:
        return aligned, aligned
    target = max(align, (target // align) * align)
    cands = set()
    t = target
    while t >= align:                       # halving chain
        cands.add((t // align) * align)
        t //= 2
    for t in range(target, align - 1, -align):   # largest exact divisor
        if aligned % t == 0:
            cands.add(t)
            break
    best = None
    for t in sorted(cands, reverse=True):
        pad = _round_up(aligned, t)
        if best is None or pad < best[1]:
            best = (t, pad)
    return best


class _KNPlan(NamedTuple):
    tk: int
    k_pad: int
    tn: int
    n_pad: int
    multi_k: bool


def _kn_plan(d_in: int, d_out: int, *,
             w_resident_max: int = _W_RESIDENT_MAX,
             k_target: int = 512, k_max_single: int = 1024,
             n_target: int = 512, n_max_single: int = 768) -> _KNPlan:
    k_aligned = _round_up(d_in, _LANE)
    n_aligned = _round_up(d_out, _LANE)
    # Weight-resident fast path: whole padded bf16 weight (double-buffered
    # allowance) fits in VMEM -> no K/N tiling, W read from HBM exactly once.
    if 2 * (k_aligned * n_aligned * 2) <= w_resident_max:
        return _KNPlan(k_aligned, k_aligned, n_aligned, n_aligned, False)
    tk, k_pad = _choose_tile(d_in, target=k_target, align=_LANE,
                             max_single=k_max_single)
    tn, n_pad = _choose_tile(d_out, target=n_target, align=_LANE,
                             max_single=n_max_single)
    return _KNPlan(tk, k_pad, tn, n_pad, tk != k_pad)


def _m_plan(m: int, kn: _KNPlan, x_itemsize: int, *, m_cap: int = 1024,
            budget: int = _VMEM_BUDGET):
    """Pick the M tile so the double-buffered working set stays within budget."""
    w_bytes = 2 * (kn.tk * kn.tn * 2)              # W tiles (bf16), 2 buffers
    bias_bytes = 2 * (kn.tn * 4)
    per_row = 2 * kn.tk * x_itemsize + 2 * kn.tn * 4   # x + out, 2 buffers each
    if kn.multi_k:
        per_row += kn.tn * 4                       # f32 accumulator scratch
    avail = max(budget - w_bytes - bias_bytes, 0)
    cap = (avail // per_row) // _SUBLANE * _SUBLANE
    cap = max(_SUBLANE, min(m_cap, cap))
    return _choose_tile(m, target=cap, align=_SUBLANE, max_single=cap)


def _split_for_megacore(tm: int, m_pad: int, kn: _KNPlan) -> int:
    """Ensure >= 2 parallel output tiles so both v7x TensorCores get work."""
    n_blocks = kn.n_pad // kn.tn
    if (m_pad // tm) * n_blocks == 1 and tm % (2 * _SUBLANE) == 0:
        tm //= 2
    return tm


# ---------------------------------------------------------------------------
# Kernels
# ---------------------------------------------------------------------------

def _linear_bias_kernel(x_ref, w_ref, b_ref, o_ref):
    """Single-K-step path (includes the weight-resident case): no accumulator."""
    acc = jnp.dot(x_ref[...].astype(w_ref.dtype), w_ref[...],
                  preferred_element_type=jnp.float32)
    o_ref[...] = (acc + b_ref[...]).astype(o_ref.dtype)


def _linear_acc_kernel(x_ref, w_ref, b_ref, o_ref, acc_ref):
    """Multi-K path: f32 accumulator initialized with the bias at k == 0."""
    k = pl.program_id(2)

    @pl.when(k == 0)
    def _init():
        acc_ref[...] = jnp.broadcast_to(b_ref[...], acc_ref.shape)

    acc_ref[...] += jnp.dot(x_ref[...].astype(w_ref.dtype), w_ref[...],
                            preferred_element_type=jnp.float32)

    @pl.when(k == pl.num_programs(2) - 1)
    def _fin():
        o_ref[...] = acc_ref[...].astype(o_ref.dtype)


def _linear_pallas(x2d, w, b2d, *, tm, tn, tk, out_dtype):
    m_pad, k_pad = x2d.shape
    _, n_pad = w.shape
    mb, nb, kb = m_pad // tm, n_pad // tn, k_pad // tk

    flops = 2 * m_pad * k_pad * n_pad
    bytes_accessed = (x2d.size * x2d.dtype.itemsize
                      + w.size * w.dtype.itemsize
                      + m_pad * n_pad * jnp.dtype(out_dtype).itemsize
                      + b2d.size * 4)
    cost = pl.CostEstimate(flops=flops, transcendentals=0,
                           bytes_accessed=bytes_accessed)

    if kb == 1:
        params = pltpu.CompilerParams(
            dimension_semantics=("parallel", "parallel"),
            vmem_limit_bytes=_VMEM_LIMIT)
        return pl.pallas_call(
            _linear_bias_kernel,
            out_shape=jax.ShapeDtypeStruct((m_pad, n_pad), out_dtype),
            grid_spec=pltpu.PrefetchScalarGridSpec(
                num_scalar_prefetch=0,
                grid=(mb, nb),
                in_specs=[
                    pl.BlockSpec((tm, tk), lambda i, j: (i, 0)),   # x
                    pl.BlockSpec((tk, tn), lambda i, j: (0, j)),   # W (resident)
                    pl.BlockSpec((1, tn), lambda i, j: (0, j)),    # bias
                ],
                out_specs=pl.BlockSpec((tm, tn), lambda i, j: (i, j)),
            ),
            compiler_params=params,
            cost_estimate=cost,
        )(x2d, w, b2d)

    params = pltpu.CompilerParams(
        dimension_semantics=("parallel", "parallel", "arbitrary"),
        vmem_limit_bytes=_VMEM_LIMIT)
    return pl.pallas_call(
        _linear_acc_kernel,
        out_shape=jax.ShapeDtypeStruct((m_pad, n_pad), out_dtype),
        grid_spec=pltpu.PrefetchScalarGridSpec(
            num_scalar_prefetch=0,
            grid=(mb, nb, kb),
            in_specs=[
                pl.BlockSpec((tm, tk), lambda i, j, k: (i, k)),    # x
                pl.BlockSpec((tk, tn), lambda i, j, k: (k, j)),    # W
                pl.BlockSpec((1, tn), lambda i, j, k: (0, j)),     # bias
            ],
            out_specs=pl.BlockSpec((tm, tn), lambda i, j, k: (i, j)),
            scratch_shapes=[pltpu.VMEM((tm, tn), jnp.float32)],
        ),
        compiler_params=params,
        cost_estimate=cost,
    )(x2d, w, b2d)


# ---------------------------------------------------------------------------
# Public API
# ---------------------------------------------------------------------------

def prepare_audio_encoder_params(weight, bias, *, compute_dtype=jnp.bfloat16,
                                 kn_plan: Optional[_KNPlan] = None):
    """Cast + pad the (D_in, D_out) weight and bias ONCE, outside the forward.

    Returns (w_padded, bias_padded, kn_plan) ready for `audio_encoder_forward`.
    """
    d_in, d_out = weight.shape
    kn = _kn_plan(d_in, d_out) if kn_plan is None else kn_plan
    w = weight.astype(compute_dtype)
    if (kn.k_pad, kn.n_pad) != (d_in, d_out):
        w = jnp.pad(w, ((0, kn.k_pad - d_in), (0, kn.n_pad - d_out)))
    b = bias.astype(jnp.float32).reshape(1, d_out)
    if kn.n_pad != d_out:
        b = jnp.pad(b, ((0, 0), (0, kn.n_pad - d_out)))
    return w, b, kn


@functools.partial(jax.jit, static_argnames=("kn", "d_in", "d_out"))
def audio_encoder_forward(x, w_padded, b_padded, *, kn: _KNPlan, d_in: int,
                          d_out: int):
    """Pallas implementation of AudioEncoder.forward (a single Linear layer).

    Args:
      x:        (..., D_in) activations (f32 or bf16).
      w_padded: padded/cast weight from `prepare_audio_encoder_params`.
      b_padded: padded f32 bias (1, n_pad).
      kn:       the K/N tiling plan returned by `prepare_audio_encoder_params`.
    Returns:
      (..., D_out), same semantics as `self.proj(x)` in PyTorch.
    """
    orig_shape = x.shape
    assert orig_shape[-1] == d_in
    x2d = x.reshape(-1, d_in)
    m = x2d.shape[0]
    compute_dtype = w_padded.dtype

    n_blocks = kn.n_pad // kn.tn
    # Pre-cast x to the streamed compute dtype only when x is re-streamed
    # (N tiled) or a pad op touches it anyway; otherwise the kernel casts
    # per-tile and x is read from HBM exactly once at its native width.
    cast_x = (n_blocks >= 2) or (kn.k_pad != d_in) or (m % _SUBLANE != 0)
    xc = x2d.astype(compute_dtype) if (cast_x and x2d.dtype != compute_dtype) else x2d
    x_itemsize = jnp.dtype(xc.dtype).itemsize

    tm, m_pad = _m_plan(m, kn, x_itemsize)
    tm = _split_for_megacore(tm, m_pad, kn)

    if (m_pad, kn.k_pad) != (m, d_in):
        xc = jnp.pad(xc, ((0, m_pad - m), (0, kn.k_pad - d_in)))

    out_pad = _linear_pallas(xc, w_padded, b_padded, tm=tm, tn=kn.tn, tk=kn.tk,
                             out_dtype=x.dtype)
    out = out_pad[:m, :d_out]
    return out.reshape(*orig_shape[:-1], d_out)


def init_audio_encoder_params(key, input_dim, output_dim):
    """PyTorch-default-like init; W stored as (in, out) (transpose of nn.Linear)."""
    kw, kb = jax.random.split(key)
    bound = 1.0 / jnp.sqrt(jnp.float32(input_dim))
    weight = jax.random.uniform(kw, (input_dim, output_dim), jnp.float32,
                                -bound, bound)
    bias = jax.random.uniform(kb, (output_dim,), jnp.float32, -bound, bound)
    return weight, bias


# ---------------------------------------------------------------------------
# Self-test
# ---------------------------------------------------------------------------

if __name__ == "__main__":
    key = jax.random.PRNGKey(0)
    k_x1, k_p1, k_x2, k_p2, k_x3, k_p3 = jax.random.split(key, 6)

    def run_case(kx, kp, shape, d_out, kn_override=None):
        *lead, d_in = shape
        x = jax.random.normal(kx, shape, jnp.float32)
        w, b = init_audio_encoder_params(kp, d_in, d_out)
        wp, bp, kn = prepare_audio_encoder_params(w, b, kn_plan=kn_override)
        y = audio_encoder_forward(x, wp, bp, kn=kn, d_in=d_in, d_out=d_out)
        y = jax.block_until_ready(y)
        # Reference with the same bf16-operand / f32-accumulate math as the kernel.
        y_ref = (x.astype(jnp.bfloat16).astype(jnp.float32)
                 @ w.astype(jnp.bfloat16).astype(jnp.float32)) + b
        assert y.shape == tuple(lead) + (d_out,)
        err = float(jnp.max(jnp.abs(y - y_ref)))
        assert jnp.allclose(y, y_ref, atol=1e-2, rtol=1e-2), err
        return y

    # Case 1: small shapes consistent with the module (weight-resident, 1 tile).
    run_case(k_x1, k_p1, (2, 8, 32), 32)

    # Case 2: ragged dims -> exercises the fixed padding heuristic
    # (640 stays 640, 320 pads only to 384) and M/K padding of x.
    run_case(k_x2, k_p2, (2, 37, 640), 320)

    # Case 3: forced tiled/multi-K path -> exercises the accumulator kernel
    # (bias init at k==0, K-last reduction) and N tiling.
    forced = _kn_plan(1024, 384, w_resident_max=0,
                      k_target=256, k_max_single=256,
                      n_target=128, n_max_single=128)
    run_case(k_x3, k_p3, (4, 256, 1024), 384, kn_override=forced)

    print("KERNEL_OK")
</pallas_src>

<mosaic_0001>
module attributes {stable_mosaic.version = 11 : i64} {
  func.func @_linear_bias_kernel(%arg0: i32, %arg1: i32, %arg2: memref<16x128xbf16, #tpu.memory_space<vmem>>, %arg3: memref<128x128xbf16, #tpu.memory_space<vmem>>, %arg4: memref<1x128xf32, #tpu.memory_space<vmem>>, %arg5: memref<16x128xf32, #tpu.memory_space<vmem>>) attributes {dimension_semantics = [#tpu.dimension_semantics<parallel>, #tpu.dimension_semantics<parallel>], iteration_bounds = array<i64: 1, 1>, scalar_prefetch = 0 : i64, scratch_operands = 0 : i64, tpu.core_type = #tpu.core_type<tc>, window_params = [{transform_indices = @transform_0, window_bounds = array<i64: 16, 128>}, {transform_indices = @transform_1, window_bounds = array<i64: 128, 128>}, {transform_indices = @transform_2, window_bounds = array<i64: 1, 128>}, {transform_indices = @transform_3, window_bounds = array<i64: 16, 128>}]} {
    %c0 = arith.constant 0 : index
    %c0_0 = arith.constant 0 : index
    %0 = vector.load %arg2[%c0, %c0_0] : memref<16x128xbf16, #tpu.memory_space<vmem>>, vector<16x128xbf16>
    %c0_1 = arith.constant 0 : index
    %c0_2 = arith.constant 0 : index
    %1 = vector.load %arg3[%c0_1, %c0_2] : memref<128x128xbf16, #tpu.memory_space<vmem>>, vector<128x128xbf16>
    %cst = arith.constant dense<0.000000e+00> : vector<16x128xf32>
    %2 = tpu.matmul %0, %1, %cst {dimension_numbers = #tpu.dot_dimension_numbers<[1], [0], [0], [1], [0, 0, 1, 1], [], []>} : vector<16x128xbf16>, vector<128x128xbf16>, vector<16x128xf32> -> vector<16x128xf32>
    %c0_3 = arith.constant 0 : index
    %c0_4 = arith.constant 0 : index
    %3 = vector.load %arg4[%c0_3, %c0_4] : memref<1x128xf32, #tpu.memory_space<vmem>>, vector<1x128xf32>
    %4 = vector.broadcast %3 : vector<1x128xf32> to vector<16x128xf32>
    %5 = arith.addf %2, %4 : vector<16x128xf32>
    %c0_5 = arith.constant 0 : index
    %c0_6 = arith.constant 0 : index
    %6 = vector.load %arg5[%c0_5, %c0_6] : memref<16x128xf32, #tpu.memory_space<vmem>>, vector<16x128xf32>
    tpu.vector_store %arg5[%c0_5, %c0_6], %5 {strides = array<i32>} : memref<16x128xf32, #tpu.memory_space<vmem>>, vector<16x128xf32>,
    return
  }
  func.func @transform_0(%arg0: i32, %arg1: i32) -> (i32, i32) {
    %c0_i32 = arith.constant 0 : i32
    %c0_i32_0 = arith.constant 0 : i32
    return %arg0, %c0_i32 : i32, i32
  }
  func.func @transform_1(%arg0: i32, %arg1: i32) -> (i32, i32) {
    %c0_i32 = arith.constant 0 : i32
    %c0_i32_0 = arith.constant 0 : i32
    return %c0_i32, %arg1 : i32, i32
  }
  func.func @transform_2(%arg0: i32, %arg1: i32) -> (i32, i32) {
    %c0_i32 = arith.constant 0 : i32
    %c0_i32_0 = arith.constant 0 : i32
    return %c0_i32, %arg1 : i32, i32
  }
  func.func @transform_3(%arg0: i32, %arg1: i32) -> (i32, i32) {
    %c0_i32 = arith.constant 0 : i32
    return %arg0, %arg1 : i32, i32
  }
}

</mosaic_0001>

<llo_original>
// kernel: audio_encoder_forward.1
$region0: #{audio_encoder_forward.1}
  #allocation0 [shape = 'u32[]', space=smem, size = 0x4, offset = 0x4, fixed_abs, tag = 'smem constant byte address 0x4 - core index']
  #allocation1 [shape = 'u32[144,128]{1,0:T(1,128)}', space=vmem, size = 0x12000, scoped, tag = 'internal scratch']
  %s0 = inlined_call_operand.vmem [shape: bf16[16,128], index: 0, kind: input, shape index: {}]
  %s1 = inlined_call_operand.hbm [shape: bf16[128,128], index: 1, kind: input, shape index: {}]
  %s2 = inlined_call_operand.vmem [shape: f32[1,128], index: 2, kind: input, shape index: {}]
  %s3 = inlined_call_operand.vmem [shape: f32[16,128], index: 3, kind: output, shape index: {}]
  %s4 = sld [smem:[#allocation0]]
  $region26: #{audio_encoder_forward.1} parent=0
    _
  %s6 = ssub.s32 1, %s4
  %s7 = scalar_select 0, %s6, %s4
  $region1: #{audio_encoder_forward.1} parent=0
    #allocation2 [shape = 'u8[32768]{0}', space=vmem, size = 0x8000, scoped, tag = 'input window, operand 1, single buffered']
    #allocation3 [shape = 's32[1]{0}', space=sflag, size = 0x4, scoped, tag = 'scoped memory for audio_encoder_forward.1']
    %8 = vsyncpa [#allocation3], 0
    // Predicated region
    $region2: #{audio_encoder_forward.1} parent=1 // pred_check
      _
    $region3: #{audio_encoder_forward.1} parent=1 // pred_check_branch
      %10 = sbr.rel (0) target = $region5
    $region4: #{audio_encoder_forward.1} parent=1 // pred_region
      _
    $region5: #{audio_encoder_forward.1} parent=1 // pred_fallthru
      _
    // Predicated region
    $region6: #{audio_encoder_forward.1} parent=1 // pred_check
      _
    $region7: #{audio_encoder_forward.1} parent=1 // pred_check_branch
      %12 = sbr.rel (0) target = $region9
    $region8: #{audio_encoder_forward.1} parent=1 // pred_region
      %s14 = ssub.s32 1024, 1024
      %15 = vsyncadd [#allocation3], %s14
      %s16 = sshll.u32 [#allocation2], 4
      %s17 = int_to_ptr.vmem [resolvable:$true] %s16
      %22 = dma.hbm_to_vmem [thread:$0]  %s1, 1024, %s17, [#allocation3], 64, 64, 4
    $region9: #{audio_encoder_forward.1} parent=1 // pred_fallthru
      _
    // Predicated region
    $region10: #{audio_encoder_forward.1} parent=1 // pred_check
      _
    $region11: #{audio_encoder_forward.1} parent=1 // pred_check_branch
      %24 = sbr.rel (0) target = $region13
    $region12: #{audio_encoder_forward.1} parent=1 // pred_region
      _
    $region13: #{audio_encoder_forward.1} parent=1 // pred_fallthru
      _
    // Predicated region
    $region14: #{audio_encoder_forward.1} parent=1 // pred_check
      _
    $region15: #{audio_encoder_forward.1} parent=1 // pred_check_branch
      %26 = sbr.rel (0) target = $region17
    $region16: #{audio_encoder_forward.1} parent=1 // pred_region
      %27 = dma.done [#allocation3], 1024
    $region17: #{audio_encoder_forward.1} parent=1 // pred_fallthru
      _
    %v29 = vld [vmem:[%s0] sm:$0xf]
    %v30 = vld [vmem:[%s0 + $0x4] sm:$0xf]
    %v31 = vld [vmem:[#allocation2] sm:$0xf]
    %v32 = vld [vmem:[#allocation2 + $0x4] sm:$0xf]
    %v33 = vld [vmem:[#allocation2 + $0x8] sm:$0xf]
    %v34 = vld [vmem:[#allocation2 + $0xc] sm:$0xf]
    %v35 = vld [vmem:[#allocation2 + $0x10] sm:$0xf]
    %v36 = vld [vmem:[#allocation2 + $0x14] sm:$0xf]
    %v37 = vld [vmem:[#allocation2 + $0x18] sm:$0xf]
    %v38 = vld [vmem:[#allocation2 + $0x1c] sm:$0xf]
    %v39 = vld [vmem:[#allocation2 + $0x20] sm:$0xf]
    %v40 = vld [vmem:[#allocation2 + $0x24] sm:$0xf]
    %v41 = vld [vmem:[#allocation2 + $0x28] sm:$0xf]
    %v42 = vld [vmem:[#allocation2 + $0x2c] sm:$0xf]
    %v43 = vld [vmem:[#allocation2 + $0x30] sm:$0xf]
    %v44 = vld [vmem:[#allocation2 + $0x34] sm:$0xf]
    %v45 = vld [vmem:[#allocation2 + $0x38] sm:$0xf]
    %v46 = vld [vmem:[#allocation2 + $0x3c] sm:$0xf]
    %v47 = vld [vmem:[%s2] sm:$0x1]
    %v49 = vlaneseq
    %v50 = vshrl.u32 %v49, 7
    %v51 = vsub.s32 0, %v50
    %v52 = vrot.slane %v47, %v51
    %v56 = vunpack.c.l.b16 %v29
    %v57 = vunpack.c.l.b16 %v30
    %v58 = vpack.c.b16 %v57, %v56
    %v76 = vunpack.c.l.b16 %v31
    %v77 = vunpack.c.l.b16 %v32
    %v78 = vunpack.c.l.b16 %v33
    %v79 = vunpack.c.l.b16 %v34
    %v80 = vunpack.c.l.b16 %v35
    %v81 = vunpack.c.l.b16 %v36
    %v82 = vunpack.c.l.b16 %v37
    %v83 = vunpack.c.l.b16 %v38
    %v84 = vunpack.c.l.b16 %v39
    %v85 = vunpack.c.l.b16 %v40
    %v86 = vunpack.c.l.b16 %v41
    %v87 = vunpack.c.l.b16 %v42
    %v88 = vunpack.c.l.b16 %v43
    %v89 = vunpack.c.l.b16 %v44
    %v90 = vunpack.c.l.b16 %v45
    %v91 = vunpack.c.l.b16 %v46
    %v92 = vpack.c.b16 %v77, %v76
    %v93 = vpack.c.b16 %v79, %v78
    %v94 = vpack.c.b16 %v81, %v80
    %v95 = vpack.c.b16 %v83, %v82
    %v96 = vpack.c.b16 %v85, %v84
    %v97 = vpack.c.b16 %v87, %v86
    %v98 = vpack.c.b16 %v89, %v88
    %v99 = vpack.c.b16 %v91, %v90
    %108 = vmatprep.subr.bf16.mxu0 0
    %109 = vmatpush1.bf16.msra.mxu0 %v99
    %110 = vmatprep.subr.bf16.mxu0 0
    %111 = vmatpush1.bf16.msra.mxu0 %v98
    %112 = vmatprep.subr.bf16.mxu0 0
    %113 = vmatpush1.bf16.msra.mxu0 %v97
    %114 = vmatprep.subr.bf16.mxu0 0
    %115 = vmatpush1.bf16.msra.mxu0 %v96
    %116 = vmatprep.subr.bf16.mxu0 0
    %117 = vmatpush1.bf16.msra.mxu0 %v95
    %118 = vmatprep.subr.bf16.mxu0 0
    %119 = vmatpush1.bf16.msra.mxu0 %v94
    %120 = vmatprep.subr.bf16.mxu0 0
    %121 = vmatpush1.bf16.msra.mxu0 %v93
    %122 = vmatprep.subr.bf16.mxu0 0
    %123 = vmatpush1.bf16.msra.mxu0 %v92
    %124 = vmatprep.subr.bf16.mxu0 0
    %125 = vmatpush2.bf16.msra.mxu0 0
    %126 = vmatprep.subr.bf16.mxu0 0
    %127 = vmatpush2.bf16.msra.mxu0 0
    %128 = vmatprep.subr.bf16.mxu0 0
    %129 = vmatpush2.bf16.msra.mxu0 0
    %130 = vmatprep.subr.bf16.mxu0 0
    %131 = vmatpush2.bf16.msra.mxu0 0
    %132 = vmatprep.subr.bf16.mxu0 0
    %133 = vmatpush2.bf16.msra.mxu0 0
    %134 = vmatprep.subr.bf16.mxu0 0
    %135 = vmatpush2.bf16.msra.mxu0 0
    %136 = vmatprep.subr.bf16.mxu0 0
    %137 = vmatpush2.bf16.msra.mxu0 0
    %138 = vmatprep.subr.bf16.mxu0 0
    %139 = vmatpush2.bf16.msra.mxu0 0
    %140 = vmatprep.mubr.bf16.mxu0 0
    %141 = vmatmul.mubr.bf16.gmra.mxu0 %v58
    %v142 = vpop.f32.mrf.mxu0
    %v143 = vadd.f32 %v52, %v142
    %v144 = vpop.f32.mrf.mxu0
    %v145 = vpop.f32.mrf.mxu0
    %v146 = vadd.f32 %v52, %v145
    %v147 = vpop.f32.mrf.mxu0
    %148 = vdwg.mxu0
    %149 = vst [vmem:[%s3] sm:$0xff] %v143
    %150 = vst [vmem:[%s3 + $0x8] sm:$0xff] %v146
    // Predicated region
    $region18: #{audio_encoder_forward.1} parent=1 // pred_check
      _
    $region19: #{audio_encoder_forward.1} parent=1 // pred_check_branch
      %152 = sbr.rel (0) target = $region21
    $region20: #{audio_encoder_forward.1} parent=1 // pred_region
      _
    $region21: #{audio_encoder_forward.1} parent=1 // pred_fallthru
      _
    // Predicated region
    $region22: #{audio_encoder_forward.1} parent=1 // pred_check
      _
    $region23: #{audio_encoder_forward.1} parent=1 // pred_check_branch
      %154 = sbr.rel (0) target = $region25
    $region24: #{audio_encoder_forward.1} parent=1 // pred_region
      _
    $region25: #{audio_encoder_forward.1} parent=1 // pred_fallthru
      _
    %155 = vsyncpa [#allocation3], 1

</llo_original>
